<compile_context>
chip_gen: v7x
topology: tpu7x:2x2x1
jax: 0.10.0
libtpu: 0.0.40
codegen_flags: <defaults>
</compile_context>

<pallas_src>
import functools
import numpy as np
import jax
import jax.numpy as jnp
from jax.experimental import pallas as pl
from jax.experimental.pallas import tpu as pltpu

# ---- Hyper-parameters (small shapes consistent with the PyTorch module) ----
D = 32                 # data dimension
K = 2                  # latent dim (z_int is a 2-D grid)
N = 8                  # number of observations
BINS = 16              # 'bins' (== L); L^2 = 256 integration points (lane-friendly)
L2 = BINS * BINS
MAX_PERM = 3           # max_permutations
M = int(D * 0.15)      # active-set size per permutation (= 4)


def _softplus(z):
    # numerically stable softplus (== log(1+exp(z)) inside Bernoulli.log_prob)
    return jnp.maximum(z, 0.0) + jnp.log1p(jnp.exp(-jnp.abs(z)))


def _ppca_kernel(x_ref, zt_ref, lpz_ref, w_ref, b_ref, out_ref, *, scale):
    # x_ref:   (N, M)   VMEM  -- active-set columns of x for the final permutation
    # zt_ref:  (K, L2)  VMEM  -- integration grid, transposed (L2 on the lane dim)
    # lpz_ref: (1, L2)  VMEM  -- log_w + log N(z; 0, I)   (log_w folded on host)
    # w_ref:   (M*K,)   SMEM  -- active-set rows of W, flattened
    # b_ref:   (M,)     SMEM  -- active-set entries of b
    # out_ref: (1, 1)   VMEM  -- fused scalar loss output
    x = x_ref[...]
    zt = zt_ref[...]

    li = lpz_ref[...]                                   # (1, L2); broadcast up below
    # VPU-only accumulation over the M active dims (no MXU push/pop); softplus sum
    # is fused so each logits row stays in vregs.
    for i in range(M):
        proj = None
        for k in range(K):
            term = w_ref[i * K + k] * zt[k:k + 1, :]    # scalar * (1, L2)
            proj = term if proj is None else proj + term
        logits = proj + b_ref[i]                        # (1, L2)
        # Bernoulli log-prob of binary x:  x*logits - softplus(logits)
        li = li + (x[:, i:i + 1] * logits - _softplus(logits))   # -> (N, L2)

    # logsumexp over the integration grid (lane dim), then the fused epilogue:
    #   -(D / (MAX_PERM * M * N)) * sum_n logsumexp_n
    mx = jnp.max(li, axis=-1, keepdims=True)                                  # (N, 1)
    lse = mx + jnp.log(jnp.sum(jnp.exp(li - mx), axis=-1, keepdims=True))     # (N, 1)
    out_ref[...] = scale * jnp.sum(lse, axis=0, keepdims=True)                # (1, 1)


def masked_ppca_forward(x, W, b, z_int, perms):
    """x: (N, D) binary f32, W: (D, K), b: (D,), z_int: (L2, K), perms: (P, D) int."""
    # torch: loss_pred[:] = logsumexp(...) inside the permutation loop, so only the
    # final permutation survives the overwrite -> compute exactly that one
    # (identical result, 1/P of the work).
    perm_np = np.asarray(perms)
    last = perm_np[-1, :M]

    # Host-side (numpy) gathers & constants: perms are static, so this constant-folds
    # instead of emitting tiny XLA gather/stack HLOs around the kernel.
    x_np = np.asarray(x, dtype=np.float32)
    W_np = np.asarray(W, dtype=np.float32)
    b_np = np.asarray(b, dtype=np.float32)
    z_np = np.asarray(z_int, dtype=np.float64)

    x_m = jnp.asarray(x_np[:, last])                         # (N, M)
    w_flat = jnp.asarray(W_np[last].reshape(-1))             # (M*K,)  -> SMEM
    b_flat = jnp.asarray(b_np[last])                         # (M,)    -> SMEM

    z_t = jnp.asarray(z_np.T, dtype=jnp.float32)             # (K, L2)
    log_w = 2.0 * np.log(10.0 / BINS)
    lpz = jnp.asarray(
        (log_w - 0.5 * np.sum(z_np ** 2, axis=1) - 0.5 * K * np.log(2.0 * np.pi))
        .reshape(1, L2),
        dtype=jnp.float32)                                   # (1, L2), log_w folded

    scale = -float(D) / float(MAX_PERM * M * N)              # fused epilogue factor

    out = pl.pallas_call(
        functools.partial(_ppca_kernel, scale=scale),
        out_shape=jax.ShapeDtypeStruct((1, 1), jnp.float32),
        grid=(1,),
        in_specs=[
            pl.BlockSpec((N, M), lambda i: (0, 0)),                    # x_m
            pl.BlockSpec((K, L2), lambda i: (0, 0)),                   # z^T
            pl.BlockSpec((1, L2), lambda i: (0, 0)),                   # log_w + log_p_z
            pl.BlockSpec(memory_space=pltpu.MemorySpace.SMEM),         # W active set
            pl.BlockSpec(memory_space=pltpu.MemorySpace.SMEM),         # b active set
        ],
        out_specs=pl.BlockSpec((1, 1), lambda i: (0, 0)),
        compiler_params=pltpu.CompilerParams(dimension_semantics=("arbitrary",)),
    )(x_m, z_t, lpz, w_flat, b_flat)

    return out[0, 0]


def reference_forward(x, W, b, z_int, perms):
    """Pure-numpy reference mirroring the PyTorch forward (runs ALL permutations)."""
    log_w = 2.0 * np.log(10.0 / BINS)
    log_p_z = -0.5 * np.sum(z_int ** 2, axis=1) - 0.5 * K * np.log(2.0 * np.pi)    # (L2,)
    loss_pred = np.zeros(x.shape[0], dtype=np.float64)
    for p in range(perms.shape[0]):
        perm = perms[p]
        W_m = W[perm][:M]
        b_m = b[perm][:M]
        logits = W_m @ z_int.T + b_m[:, None]                                      # (M, L2)
        # x*log(sigmoid) + (1-x)*log(1-sigmoid) == x*logits - softplus(logits) for binary x
        log_prob_x = x[:, perm][:, :M] @ logits - np.logaddexp(0.0, logits).sum(axis=0, keepdims=True)
        log_integrand = log_w + log_p_z[None, :] + log_prob_x
        mx = log_integrand.max(axis=1, keepdims=True)
        loss_pred[:] = (mx + np.log(np.exp(log_integrand - mx).sum(axis=1, keepdims=True)))[:, 0]
    loss_pred = D * loss_pred / (MAX_PERM * M)
    return -(loss_pred.sum() / N)


if __name__ == "__main__":
    key = jax.random.PRNGKey(0)
    kx, kw, kb, kp = jax.random.split(key, 4)

    # Binary observations, deterministic parameter init (shapes per module __init__).
    x = jax.random.bernoulli(kx, 0.5, (N, D)).astype(jnp.float32)
    W = jax.random.normal(kw, (D, K), dtype=jnp.float32)
    b = jax.random.normal(kb, (D,), dtype=jnp.float32)

    # Deterministic stand-in for torch.randperm inside the forward loop.
    # TODO(synk): torch.randperm draws fresh permutations per call; here they are fixed PRNGKey(0) draws.
    perm_keys = jax.random.split(kp, MAX_PERM)
    perms = jnp.stack([jax.random.permutation(k, D) for k in perm_keys])

    # z_int grid: meshgrid(linspace(-5,5,bins), indexing='xy'), flattened, shape (L2, 2).
    zx = jnp.linspace(-5.0, 5.0, BINS)
    z1, z2 = jnp.meshgrid(zx, zx, indexing="xy")
    z_int = jnp.stack([z1.reshape(-1), z2.reshape(-1)], axis=1).astype(jnp.float32)

    out = masked_ppca_forward(x, W, b, z_int, perms)
    out = jax.block_until_ready(out)

    ref = reference_forward(np.asarray(x, dtype=np.float64), np.asarray(W, dtype=np.float64),
                            np.asarray(b, dtype=np.float64), np.asarray(z_int, dtype=np.float64),
                            np.asarray(perms))
    assert np.allclose(float(out), float(ref), rtol=1e-4, atol=1e-4), (float(out), float(ref))
    print("KERNEL_OK")
</pallas_src>

<mosaic_0001>
module attributes {stable_mosaic.version = 11 : i64} {
  func.func @_ppca_kernel(%arg0: i32, %arg1: memref<8x4xf32, #tpu.memory_space<vmem>>, %arg2: memref<2x256xf32, #tpu.memory_space<vmem>>, %arg3: memref<1x256xf32, #tpu.memory_space<vmem>>, %arg4: memref<8xf32, #tpu.memory_space<smem>>, %arg5: memref<4xf32, #tpu.memory_space<smem>>, %arg6: memref<1x1xf32, #tpu.memory_space<vmem>>) attributes {dimension_semantics = [#tpu.dimension_semantics<arbitrary>], iteration_bounds = array<i64: 1>, scalar_prefetch = 0 : i64, scratch_operands = 0 : i64, tpu.core_type = #tpu.core_type<tc>, window_params = [{pipeline_mode = #tpu.pipeline_mode<synchronous>, transform_indices = @transform_0, window_bounds = array<i64: 8, 4>}, {pipeline_mode = #tpu.pipeline_mode<synchronous>, transform_indices = @transform_1, window_bounds = array<i64: 2, 256>}, {pipeline_mode = #tpu.pipeline_mode<synchronous>, transform_indices = @transform_2, window_bounds = array<i64: 1, 256>}, {transform_indices = @transform_3, window_bounds = array<i64: 8>}, {transform_indices = @transform_4, window_bounds = array<i64: 4>}, {pipeline_mode = #tpu.pipeline_mode<synchronous>, transform_indices = @transform_5, window_bounds = array<i64: 1, 1>}]} {
    %c0 = arith.constant 0 : index
    %c0_0 = arith.constant 0 : index
    %0 = vector.load %arg1[%c0, %c0_0] : memref<8x4xf32, #tpu.memory_space<vmem>>, vector<8x4xf32>
    %c0_1 = arith.constant 0 : index
    %c0_2 = arith.constant 0 : index
    %1 = vector.load %arg2[%c0_1, %c0_2] : memref<2x256xf32, #tpu.memory_space<vmem>>, vector<2x256xf32>
    %c0_3 = arith.constant 0 : index
    %c0_4 = arith.constant 0 : index
    %2 = vector.load %arg3[%c0_3, %c0_4] : memref<1x256xf32, #tpu.memory_space<vmem>>, vector<1x256xf32>
    %c0_5 = arith.constant 0 : index
    %3 = memref.load %arg4[%c0_5] : memref<8xf32, #tpu.memory_space<smem>>
    %4 = vector.extract_strided_slice %1 {offsets = [0, 0], sizes = [1, 256], strides = [1, 1]} : vector<2x256xf32> to vector<1x256xf32>
    %5 = vector.broadcast %3 : f32 to vector<1x256xf32>
    %6 = arith.mulf %5, %4 : vector<1x256xf32>
    %c1 = arith.constant 1 : index
    %7 = memref.load %arg4[%c1] : memref<8xf32, #tpu.memory_space<smem>>
    %8 = vector.extract_strided_slice %1 {offsets = [1, 0], sizes = [1, 256], strides = [1, 1]} : vector<2x256xf32> to vector<1x256xf32>
    %9 = vector.broadcast %7 : f32 to vector<1x256xf32>
    %10 = arith.mulf %9, %8 : vector<1x256xf32>
    %11 = arith.addf %6, %10 : vector<1x256xf32>
    %c0_6 = arith.constant 0 : index
    %12 = memref.load %arg5[%c0_6] : memref<4xf32, #tpu.memory_space<smem>>
    %13 = vector.broadcast %12 : f32 to vector<1x256xf32>
    %14 = arith.addf %11, %13 : vector<1x256xf32>
    %15 = vector.extract_strided_slice %0 {offsets = [0, 0], sizes = [8, 1], strides = [1, 1]} : vector<8x4xf32> to vector<8x1xf32>
    %16 = vector.broadcast %15 : vector<8x1xf32> to vector<8x256xf32>
    %17 = vector.broadcast %14 : vector<1x256xf32> to vector<8x256xf32>
    %18 = arith.mulf %16, %17 : vector<8x256xf32>
    %cst = arith.constant 0.000000e+00 : f32
    %19 = vector.broadcast %cst : f32 to vector<1x256xf32>
    %20 = arith.maximumf %14, %19 : vector<1x256xf32>
    %21 = math.absf %14 : vector<1x256xf32>
    %cst_7 = arith.constant 0.000000e+00 : f32
    %22 = vector.broadcast %cst_7 : f32 to vector<1x256xf32>
    %23 = arith.subf %22, %21 : vector<1x256xf32>
    %24 = math.exp %23 : vector<1x256xf32>
    %25 = math.log1p %24 : vector<1x256xf32>
    %26 = arith.addf %20, %25 : vector<1x256xf32>
    %27 = vector.broadcast %26 : vector<1x256xf32> to vector<8x256xf32>
    %28 = arith.subf %18, %27 : vector<8x256xf32>
    %29 = vector.broadcast %2 : vector<1x256xf32> to vector<8x256xf32>
    %30 = arith.addf %29, %28 : vector<8x256xf32>
    %c2 = arith.constant 2 : index
    %31 = memref.load %arg4[%c2] : memref<8xf32, #tpu.memory_space<smem>>
    %32 = vector.extract_strided_slice %1 {offsets = [0, 0], sizes = [1, 256], strides = [1, 1]} : vector<2x256xf32> to vector<1x256xf32>
    %33 = vector.broadcast %31 : f32 to vector<1x256xf32>
    %34 = arith.mulf %33, %32 : vector<1x256xf32>
    %c3 = arith.constant 3 : index
    %35 = memref.load %arg4[%c3] : memref<8xf32, #tpu.memory_space<smem>>
    %36 = vector.extract_strided_slice %1 {offsets = [1, 0], sizes = [1, 256], strides = [1, 1]} : vector<2x256xf32> to vector<1x256xf32>
    %37 = vector.broadcast %35 : f32 to vector<1x256xf32>
    %38 = arith.mulf %37, %36 : vector<1x256xf32>
    %39 = arith.addf %34, %38 : vector<1x256xf32>
    %c1_8 = arith.constant 1 : index
    %40 = memref.load %arg5[%c1_8] : memref<4xf32, #tpu.memory_space<smem>>
    %41 = vector.broadcast %40 : f32 to vector<1x256xf32>
    %42 = arith.addf %39, %41 : vector<1x256xf32>
    %43 = vector.extract_strided_slice %0 {offsets = [0, 1], sizes = [8, 1], strides = [1, 1]} : vector<8x4xf32> to vector<8x1xf32>
    %44 = vector.broadcast %43 : vector<8x1xf32> to vector<8x256xf32>
    %45 = vector.broadcast %42 : vector<1x256xf32> to vector<8x256xf32>
    %46 = arith.mulf %44, %45 : vector<8x256xf32>
    %cst_9 = arith.constant 0.000000e+00 : f32
    %47 = vector.broadcast %cst_9 : f32 to vector<1x256xf32>
    %48 = arith.maximumf %42, %47 : vector<1x256xf32>
    %49 = math.absf %42 : vector<1x256xf32>
    %cst_10 = arith.constant 0.000000e+00 : f32
    %50 = vector.broadcast %cst_10 : f32 to vector<1x256xf32>
    %51 = arith.subf %50, %49 : vector<1x256xf32>
    %52 = math.exp %51 : vector<1x256xf32>
    %53 = math.log1p %52 : vector<1x256xf32>
    %54 = arith.addf %48, %53 : vector<1x256xf32>
    %55 = vector.broadcast %54 : vector<1x256xf32> to vector<8x256xf32>
    %56 = arith.subf %46, %55 : vector<8x256xf32>
    %57 = arith.addf %30, %56 : vector<8x256xf32>
    %c4 = arith.constant 4 : index
    %58 = memref.load %arg4[%c4] : memref<8xf32, #tpu.memory_space<smem>>
    %59 = vector.extract_strided_slice %1 {offsets = [0, 0], sizes = [1, 256], strides = [1, 1]} : vector<2x256xf32> to vector<1x256xf32>
    %60 = vector.broadcast %58 : f32 to vector<1x256xf32>
    %61 = arith.mulf %60, %59 : vector<1x256xf32>
    %c5 = arith.constant 5 : index
    %62 = memref.load %arg4[%c5] : memref<8xf32, #tpu.memory_space<smem>>
    %63 = vector.extract_strided_slice %1 {offsets = [1, 0], sizes = [1, 256], strides = [1, 1]} : vector<2x256xf32> to vector<1x256xf32>
    %64 = vector.broadcast %62 : f32 to vector<1x256xf32>
    %65 = arith.mulf %64, %63 : vector<1x256xf32>
    %66 = arith.addf %61, %65 : vector<1x256xf32>
    %c2_11 = arith.constant 2 : index
    %67 = memref.load %arg5[%c2_11] : memref<4xf32, #tpu.memory_space<smem>>
    %68 = vector.broadcast %67 : f32 to vector<1x256xf32>
    %69 = arith.addf %66, %68 : vector<1x256xf32>
    %70 = vector.extract_strided_slice %0 {offsets = [0, 2], sizes = [8, 1], strides = [1, 1]} : vector<8x4xf32> to vector<8x1xf32>
    %71 = vector.broadcast %70 : vector<8x1xf32> to vector<8x256xf32>
    %72 = vector.broadcast %69 : vector<1x256xf32> to vector<8x256xf32>
    %73 = arith.mulf %71, %72 : vector<8x256xf32>
    %cst_12 = arith.constant 0.000000e+00 : f32
    %74 = vector.broadcast %cst_12 : f32 to vector<1x256xf32>
    %75 = arith.maximumf %69, %74 : vector<1x256xf32>
    %76 = math.absf %69 : vector<1x256xf32>
    %cst_13 = arith.constant 0.000000e+00 : f32
    %77 = vector.broadcast %cst_13 : f32 to vector<1x256xf32>
    %78 = arith.subf %77, %76 : vector<1x256xf32>
    %79 = math.exp %78 : vector<1x256xf32>
    %80 = math.log1p %79 : vector<1x256xf32>
    %81 = arith.addf %75, %80 : vector<1x256xf32>
    %82 = vector.broadcast %81 : vector<1x256xf32> to vector<8x256xf32>
    %83 = arith.subf %73, %82 : vector<8x256xf32>
    %84 = arith.addf %57, %83 : vector<8x256xf32>
    %c6 = arith.constant 6 : index
    %85 = memref.load %arg4[%c6] : memref<8xf32, #tpu.memory_space<smem>>
    %86 = vector.extract_strided_slice %1 {offsets = [0, 0], sizes = [1, 256], strides = [1, 1]} : vector<2x256xf32> to vector<1x256xf32>
    %87 = vector.broadcast %85 : f32 to vector<1x256xf32>
    %88 = arith.mulf %87, %86 : vector<1x256xf32>
    %c7 = arith.constant 7 : index
    %89 = memref.load %arg4[%c7] : memref<8xf32, #tpu.memory_space<smem>>
    %90 = vector.extract_strided_slice %1 {offsets = [1, 0], sizes = [1, 256], strides = [1, 1]} : vector<2x256xf32> to vector<1x256xf32>
    %91 = vector.broadcast %89 : f32 to vector<1x256xf32>
    %92 = arith.mulf %91, %90 : vector<1x256xf32>
    %93 = arith.addf %88, %92 : vector<1x256xf32>
    %c3_14 = arith.constant 3 : index
    %94 = memref.load %arg5[%c3_14] : memref<4xf32, #tpu.memory_space<smem>>
    %95 = vector.broadcast %94 : f32 to vector<1x256xf32>
    %96 = arith.addf %93, %95 : vector<1x256xf32>
    %97 = vector.extract_strided_slice %0 {offsets = [0, 3], sizes = [8, 1], strides = [1, 1]} : vector<8x4xf32> to vector<8x1xf32>
    %98 = vector.broadcast %97 : vector<8x1xf32> to vector<8x256xf32>
    %99 = vector.broadcast %96 : vector<1x256xf32> to vector<8x256xf32>
    %100 = arith.mulf %98, %99 : vector<8x256xf32>
    %cst_15 = arith.constant 0.000000e+00 : f32
    %101 = vector.broadcast %cst_15 : f32 to vector<1x256xf32>
    %102 = arith.maximumf %96, %101 : vector<1x256xf32>
    %103 = math.absf %96 : vector<1x256xf32>
    %cst_16 = arith.constant 0.000000e+00 : f32
    %104 = vector.broadcast %cst_16 : f32 to vector<1x256xf32>
    %105 = arith.subf %104, %103 : vector<1x256xf32>
    %106 = math.exp %105 : vector<1x256xf32>
    %107 = math.log1p %106 : vector<1x256xf32>
    %108 = arith.addf %102, %107 : vector<1x256xf32>
    %109 = vector.broadcast %108 : vector<1x256xf32> to vector<8x256xf32>
    %110 = arith.subf %100, %109 : vector<8x256xf32>
    %111 = arith.addf %84, %110 : vector<8x256xf32>
    %cst_17 = arith.constant dense<0xFF800000> : vector<8xf32>
    %112 = vector.multi_reduction <maximumf>, %111, %cst_17 [1] : vector<8x256xf32> to vector<8xf32>
    %113 = vector.shape_cast %112 : vector<8xf32> to vector<8x1xf32>
    %114 = vector.broadcast %113 : vector<8x1xf32> to vector<8x256xf32>
    %115 = arith.subf %111, %114 : vector<8x256xf32>
    %116 = math.exp %115 : vector<8x256xf32>
    %cst_18 = arith.constant dense<0.000000e+00> : vector<8xf32>
    %117 = vector.multi_reduction <add>, %116, %cst_18 [1] : vector<8x256xf32> to vector<8xf32>
    %118 = vector.shape_cast %117 : vector<8xf32> to vector<8x1xf32>
    %119 = math.log %118 : vector<8x1xf32>
    %120 = arith.addf %113, %119 : vector<8x1xf32>
    %cst_19 = arith.constant dense<0.000000e+00> : vector<1xf32>
    %121 = vector.multi_reduction <add>, %120, %cst_19 [0] : vector<8x1xf32> to vector<1xf32>
    %122 = vector.shape_cast %121 : vector<1xf32> to vector<1x1xf32>
    %cst_20 = arith.constant -0.333333343 : f32
    %123 = vector.broadcast %cst_20 : f32 to vector<1x1xf32>
    %124 = arith.mulf %123, %122 : vector<1x1xf32>
    %c0_21 = arith.constant 0 : index
    %c0_22 = arith.constant 0 : index
    %125 = vector.load %arg6[%c0_21, %c0_22] : memref<1x1xf32, #tpu.memory_space<vmem>>, vector<1x1xf32>
    tpu.vector_store %arg6[%c0_21, %c0_22], %124 {strides = array<i32>} : memref<1x1xf32, #tpu.memory_space<vmem>>, vector<1x1xf32>,
    return
  }
  func.func @transform_0(%arg0: i32) -> (i32, i32) {
    %c0_i32 = arith.constant 0 : i32
    %c0_i32_0 = arith.constant 0 : i32
    %c0_i32_1 = arith.constant 0 : i32
    return %c0_i32, %c0_i32_0 : i32, i32
  }
  func.func @transform_1(%arg0: i32) -> (i32, i32) {
    %c0_i32 = arith.constant 0 : i32
    %c0_i32_0 = arith.constant 0 : i32
    %c0_i32_1 = arith.constant 0 : i32
    return %c0_i32, %c0_i32_0 : i32, i32
  }
  func.func @transform_2(%arg0: i32) -> (i32, i32) {
    %c0_i32 = arith.constant 0 : i32
    %c0_i32_0 = arith.constant 0 : i32
    %c0_i32_1 = arith.constant 0 : i32
    return %c0_i32, %c0_i32_0 : i32, i32
  }
  func.func @transform_3(%arg0: i32) -> i32 {
    %c0_i32 = arith.constant 0 : i32
    %c0_i32_0 = arith.constant 0 : i32
    return %c0_i32 : i32
  }
  func.func @transform_4(%arg0: i32) -> i32 {
    %c0_i32 = arith.constant 0 : i32
    %c0_i32_0 = arith.constant 0 : i32
    return %c0_i32 : i32
  }
  func.func @transform_5(%arg0: i32) -> (i32, i32) {
    %c0_i32 = arith.constant 0 : i32
    %c0_i32_0 = arith.constant 0 : i32
    %c0_i32_1 = arith.constant 0 : i32
    return %c0_i32, %c0_i32_0 : i32, i32
  }
}

</mosaic_0001>

<llo_original>
// kernel: tpu_custom_call.1
$region0: #{tpu_custom_call.1}
  #allocation0 [shape = 'u32[]', space=smem, size = 0x4, offset = 0x4, fixed_abs, tag = 'smem constant byte address 0x4 - core index']
  #allocation1 [shape = 'u32[144,128]{1,0:T(1,128)}', space=vmem, size = 0x12000, scoped, tag = 'internal scratch']
  %s0 = inlined_call_operand.vmem [shape: f32[8,4], index: 0, kind: input, shape index: {}]
  %s1 = inlined_call_operand.vmem [shape: f32[2,256], index: 1, kind: input, shape index: {}]
  %s2 = inlined_call_operand.vmem [shape: f32[1,256], index: 2, kind: input, shape index: {}]
  %s3 = inlined_call_operand.vmem [shape: f32[8], index: 3, kind: input, shape index: {}]
  %s4 = inlined_call_operand.vmem [shape: f32[4], index: 4, kind: input, shape index: {}]
  %s5 = inlined_call_operand.hbm [shape: f32[1,1], index: 5, kind: output, shape index: {}]
  %s6 = sld [smem:[#allocation0]]
  $region38: #{tpu_custom_call.1} parent=0
    _
  %s8 = ssub.s32 1, %s6
  %s9 = scalar_select 0, %s8, %s6
  $region1: #{tpu_custom_call.1} parent=0
    #allocation2 [shape = 'u8[512]{0}', space=smem, size = 0x200, scoped, tag = 'input window, operand 3, single buffered']
    #allocation3 [shape = 's32[1]{0}', space=sflag, size = 0x4, scoped, tag = 'scoped memory for tpu_custom_call.1']
    #allocation4 [shape = 's32[1]{0}', space=sflag, size = 0x4, scoped, tag = 'scoped memory for tpu_custom_call.1']
    #allocation5 [shape = 'u8[512]{0}', space=smem, size = 0x200, scoped, tag = 'input window, operand 4, single buffered']
    #allocation6 [shape = 's32[1]{0}', space=sflag, size = 0x4, scoped, tag = 'scoped memory for tpu_custom_call.1']
    #allocation7 [shape = 'u8[512]{0}', space=vmem, size = 0x400, scoped, tag = 'output window, operand 0, single buffered']
    %10 = vsyncpa [#allocation4], 0
    %11 = vsyncpa [#allocation6], 0
    %12 = vsyncpa [#allocation3], 0
    // Predicated region
    $region2: #{tpu_custom_call.1} parent=1 // pred_check
      _
    $region3: #{tpu_custom_call.1} parent=1 // pred_check_branch
      %14 = sbr.rel (0) target = $region5
    $region4: #{tpu_custom_call.1} parent=1 // pred_region
      _
    $region5: #{tpu_custom_call.1} parent=1 // pred_fallthru
      _
    // Predicated region
    $region6: #{tpu_custom_call.1} parent=1 // pred_check
      _
    $region7: #{tpu_custom_call.1} parent=1 // pred_check_branch
      %16 = sbr.rel (0) target = $region9
    $region8: #{tpu_custom_call.1} parent=1 // pred_region
      _
    $region9: #{tpu_custom_call.1} parent=1 // pred_fallthru
      _
    // Predicated region
    $region10: #{tpu_custom_call.1} parent=1 // pred_check
      _
    $region11: #{tpu_custom_call.1} parent=1 // pred_check_branch
      %18 = sbr.rel (0) target = $region13
    $region12: #{tpu_custom_call.1} parent=1 // pred_region
      _
    $region13: #{tpu_custom_call.1} parent=1 // pred_fallthru
      _
    // Predicated region
    $region14: #{tpu_custom_call.1} parent=1 // pred_check
      _
    $region15: #{tpu_custom_call.1} parent=1 // pred_check_branch
      %20 = sbr.rel (0) target = $region17
    $region16: #{tpu_custom_call.1} parent=1 // pred_region
      %s22 = ssub.s32 16, 16
      %23 = vsyncadd [#allocation4], %s22
      %s25 = sshll.u32 %s3, 4
      %s26 = int_to_ptr.vmem [resolvable:$true] %s25
      %28 = dma.vmem_to_smem %s26, 16, [#allocation2], [#allocation4]
    $region17: #{tpu_custom_call.1} parent=1 // pred_fallthru
      _
    // Predicated region
    $region18: #{tpu_custom_call.1} parent=1 // pred_check
      _
    $region19: #{tpu_custom_call.1} parent=1 // pred_check_branch
      %30 = sbr.rel (0) target = $region21
    $region20: #{tpu_custom_call.1} parent=1 // pred_region
      %s32 = ssub.s32 16, 16
      %33 = vsyncadd [#allocation6], %s32
      %s35 = sshll.u32 %s4, 4
      %s36 = int_to_ptr.vmem [resolvable:$true] %s35
      %38 = dma.vmem_to_smem %s36, 16, [#allocation5], [#allocation6]
    $region21: #{tpu_custom_call.1} parent=1 // pred_fallthru
      _
    // Predicated region
    $region22: #{tpu_custom_call.1} parent=1 // pred_check
      _
    $region23: #{tpu_custom_call.1} parent=1 // pred_check_branch
      %40 = sbr.rel (0) target = $region25
    $region24: #{tpu_custom_call.1} parent=1 // pred_region
      %41 = dma.done [#allocation4], 16
    $region25: #{tpu_custom_call.1} parent=1 // pred_fallthru
      _
    // Predicated region
    $region26: #{tpu_custom_call.1} parent=1 // pred_check
      _
    $region27: #{tpu_custom_call.1} parent=1 // pred_check_branch
      %43 = sbr.rel (0) target = $region29
    $region28: #{tpu_custom_call.1} parent=1 // pred_region
      %44 = dma.done [#allocation6], 16
    $region29: #{tpu_custom_call.1} parent=1 // pred_fallthru
      _
    %45 = sfence
    %v46 = vld [vmem:[%s0] sm:$0xff]
    %v47 = vld [vmem:[%s1] sm:$0xf]
    %v48 = vld [vmem:[%s2] sm:$0x3]
    %s49 = sld [smem:[#allocation2]]
    %v50 = vstv %s49
    %v51 = vmul.f32 %v50, %v47
    %s52 = sld [smem:[#allocation2 + $0x1]]
    %v53 = vstv %s52
    %v54 = vmul.f32 %v53, %v47
    %v56 = vrot.slane %v54, 7
    %v57 = vrot.slane %v56, 2
    %v59 = vadd.f32 %v51, %v57
    %s60 = sld [smem:[#allocation5]]
    %v61 = vstv %s60
    %v62 = vadd.f32 %v59, %v61
    %64 = vset.pattern.permute.xlu0 0
    %65 = vperm.xlu0 %64, %v46
    %v66 = vpop.permute.xlu0 %65
    %v69 = vlaneseq
    %v70 = vshrl.u32 %v69, 7
    %v71 = vsub.s32 0, %v70
    %v72 = vrot.slane %v62, %v71
    %v73 = vlaneseq
    %v74 = vshrl.u32 %v73, 7
    %v75 = vsub.s32 2, %v74
    %v76 = vrot.slane %v62, %v75
    %v79 = vlaneseq
    %v80 = vshrl.u32 %v79, 7
    %v81 = vsub.s32 0, %v80
    %v82 = vrot.slane %v72, %v81
    %v83 = vlaneseq
    %v84 = vshrl.u32 %v83, 7
    %v85 = vsub.s32 0, %v84
    %v86 = vrot.slane %v76, %v85
    %v87 = vmul.f32 %v66, %v82
    %v88 = vmul.f32 %v66, %v86
    %v89 = vmax.f32 %v62, 0.0
    %v90 = vand.u32 2147483647, %v62
    %v91 = vsub.f32 0.0, %v90
    %v92 = vmul.f32 %v91, 1.442695
    %v93 = vpow.pop %v92
    %v94 = vadd.f32 %v93, 1.0
    %v95 = vlog2.pop %v94
    %v96 = vmul.f32 %v95, 0.6931472
    %v97 = vmul.f32 -0.5, %v93
    %v98 = vadd.f32 %v97, 1.0
    %v99 = vmul.f32 %v98, %v93
    %v100 = vand.u32 2147483647, %v93
    %vm101 = vcmp.lt.f32.partialorder %v100, 0.0004427343
    %v102 = vsel %vm101, %v99, %v96
    %v103 = vadd.f32 %v89, %v102
    %v105 = vlaneseq
    %v106 = vshrl.u32 %v105, 7
    %v107 = vsub.s32 0, %v106
    %v108 = vrot.slane %v103, %v107
    %v109 = vlaneseq
    %v110 = vshrl.u32 %v109, 7
    %v111 = vsub.s32 2, %v110
    %v112 = vrot.slane %v103, %v111
    %v115 = vlaneseq
    %v116 = vshrl.u32 %v115, 7
    %v117 = vsub.s32 0, %v116
    %v118 = vrot.slane %v108, %v117
    %v119 = vlaneseq
    %v120 = vshrl.u32 %v119, 7
    %v121 = vsub.s32 0, %v120
    %v122 = vrot.slane %v112, %v121
    %v123 = vsub.f32 %v87, %v118
    %v124 = vsub.f32 %v88, %v122
    %v126 = vlaneseq
    %v127 = vshrl.u32 %v126, 7
    %v128 = vsub.s32 0, %v127
    %v129 = vrot.slane %v48, %v128
    %v130 = vlaneseq
    %v131 = vshrl.u32 %v130, 7
    %v132 = vsub.s32 1, %v131
    %v133 = vrot.slane %v48, %v132
    %v136 = vadd.f32 %v129, %v123
    %v137 = vadd.f32 %v133, %v124
    %s138 = sld [smem:[#allocation2 + $0x2]]
    %v139 = vstv %s138
    %v140 = vmul.f32 %v139, %v47
    %s141 = sld [smem:[#allocation2 + $0x3]]
    %v142 = vstv %s141
    %v143 = vmul.f32 %v142, %v47
    %v145 = vrot.slane %v143, 7
    %v146 = vrot.slane %v145, 2
    %v148 = vadd.f32 %v140, %v146
    %s149 = sld [smem:[#allocation5 + $0x1]]
    %v150 = vstv %s149
    %v151 = vadd.f32 %v148, %v150
    %152 = vset.pattern.permute.xlu0 1
    %153 = vperm.xlu0 %152, %v46
    %v154 = vpop.permute.xlu0 %153
    %v157 = vlaneseq
    %v158 = vshrl.u32 %v157, 7
    %v159 = vsub.s32 0, %v158
    %v160 = vrot.slane %v151, %v159
    %v161 = vlaneseq
    %v162 = vshrl.u32 %v161, 7
    %v163 = vsub.s32 2, %v162
    %v164 = vrot.slane %v151, %v163
    %v167 = vlaneseq
    %v168 = vshrl.u32 %v167, 7
    %v169 = vsub.s32 0, %v168
    %v170 = vrot.slane %v160, %v169
    %v171 = vlaneseq
    %v172 = vshrl.u32 %v171, 7
    %v173 = vsub.s32 0, %v172
    %v174 = vrot.slane %v164, %v173
    %v175 = vmul.f32 %v154, %v170
    %v176 = vmul.f32 %v154, %v174
    %v177 = vmax.f32 %v151, 0.0
    %v178 = vand.u32 2147483647, %v151
    %v179 = vsub.f32 0.0, %v178
    %v180 = vmul.f32 %v179, 1.442695
    %v181 = vpow.pop %v180
    %v182 = vadd.f32 %v181, 1.0
    %v183 = vlog2.pop %v182
    %v184 = vmul.f32 %v183, 0.6931472
    %v185 = vmul.f32 -0.5, %v181
    %v186 = vadd.f32 %v185, 1.0
    %v187 = vmul.f32 %v186, %v181
    %v188 = vand.u32 2147483647, %v181
    %vm189 = vcmp.lt.f32.partialorder %v188, 0.0004427343
    %v190 = vsel %vm189, %v187, %v184
    %v191 = vadd.f32 %v177, %v190
    %v193 = vlaneseq
    %v194 = vshrl.u32 %v193, 7
    %v195 = vsub.s32 0, %v194
    %v196 = vrot.slane %v191, %v195
    %v197 = vlaneseq
    %v198 = vshrl.u32 %v197, 7
    %v199 = vsub.s32 2, %v198
    %v200 = vrot.slane %v191, %v199
    %v203 = vlaneseq
    %v204 = vshrl.u32 %v203, 7
    %v205 = vsub.s32 0, %v204
    %v206 = vrot.slane %v196, %v205
    %v207 = vlaneseq
    %v208 = vshrl.u32 %v207, 7
    %v209 = vsub.s32 0, %v208
    %v210 = vrot.slane %v200, %v209
    %v211 = vsub.f32 %v175, %v206
    %v212 = vsub.f32 %v176, %v210
    %v213 = vadd.f32 %v136, %v211
    %v214 = vadd.f32 %v137, %v212
    %s215 = sld [smem:[#allocation2 + $0x4]]
    %v216 = vstv %s215
    %v217 = vmul.f32 %v216, %v47
    %s218 = sld [smem:[#allocation2 + $0x5]]
    %v219 = vstv %s218
    %v220 = vmul.f32 %v219, %v47
    %v222 = vrot.slane %v220, 7
    %v223 = vrot.slane %v222, 2
    %v225 = vadd.f32 %v217, %v223
    %s226 = sld [smem:[#allocation5 + $0x2]]
    %v227 = vstv %s226
    %v228 = vadd.f32 %v225, %v227
    %229 = vset.pattern.permute.xlu0 2
    %230 = vperm.xlu0 %229, %v46
    %v231 = vpop.permute.xlu0 %230
    %v234 = vlaneseq
    %v235 = vshrl.u32 %v234, 7
    %v236 = vsub.s32 0, %v235
    %v237 = vrot.slane %v228, %v236
    %v238 = vlaneseq
    %v239 = vshrl.u32 %v238, 7
    %v240 = vsub.s32 2, %v239
    %v241 = vrot.slane %v228, %v240
    %v244 = vlaneseq
    %v245 = vshrl.u32 %v244, 7
    %v246 = vsub.s32 0, %v245
    %v247 = vrot.slane %v237, %v246
    %v248 = vlaneseq
    %v249 = vshrl.u32 %v248, 7
    %v250 = vsub.s32 0, %v249
    %v251 = vrot.slane %v241, %v250
    %v252 = vmul.f32 %v231, %v247
    %v253 = vmul.f32 %v231, %v251
    %v254 = vmax.f32 %v228, 0.0
    %v255 = vand.u32 2147483647, %v228
    %v256 = vsub.f32 0.0, %v255
    %v257 = vmul.f32 %v256, 1.442695
    %v258 = vpow.pop %v257
    %v259 = vadd.f32 %v258, 1.0
    %v260 = vlog2.pop %v259
    %v261 = vmul.f32 %v260, 0.6931472
    %v262 = vmul.f32 -0.5, %v258
    %v263 = vadd.f32 %v262, 1.0
    %v264 = vmul.f32 %v263, %v258
    %v265 = vand.u32 2147483647, %v258
    %vm266 = vcmp.lt.f32.partialorder %v265, 0.0004427343
    %v267 = vsel %vm266, %v264, %v261
    %v268 = vadd.f32 %v254, %v267
    %v270 = vlaneseq
    %v271 = vshrl.u32 %v270, 7
    %v272 = vsub.s32 0, %v271
    %v273 = vrot.slane %v268, %v272
    %v274 = vlaneseq
    %v275 = vshrl.u32 %v274, 7
    %v276 = vsub.s32 2, %v275
    %v277 = vrot.slane %v268, %v276
    %v280 = vlaneseq
    %v281 = vshrl.u32 %v280, 7
    %v282 = vsub.s32 0, %v281
    %v283 = vrot.slane %v273, %v282
    %v284 = vlaneseq
    %v285 = vshrl.u32 %v284, 7
    %v286 = vsub.s32 0, %v285
    %v287 = vrot.slane %v277, %v286
    %v288 = vsub.f32 %v252, %v283
    %v289 = vsub.f32 %v253, %v287
    %v290 = vadd.f32 %v213, %v288
    %v291 = vadd.f32 %v214, %v289
    %s292 = sld [smem:[#allocation2 + $0x6]]
    %v293 = vstv %s292
    %v294 = vmul.f32 %v293, %v47
    %s295 = sld [smem:[#allocation2 + $0x7]]
    %v296 = vstv %s295
    %v297 = vmul.f32 %v296, %v47
    %v299 = vrot.slane %v297, 7
    %v300 = vrot.slane %v299, 2
    %v302 = vadd.f32 %v294, %v300
    %s303 = sld [smem:[#allocation5 + $0x3]]
    %v304 = vstv %s303
    %v305 = vadd.f32 %v302, %v304
    %306 = vset.pattern.permute.xlu0 3
    %307 = vperm.xlu0 %306, %v46
    %v308 = vpop.permute.xlu0 %307
    %v311 = vlaneseq
    %v312 = vshrl.u32 %v311, 7
    %v313 = vsub.s32 0, %v312
    %v314 = vrot.slane %v305, %v313
    %v315 = vlaneseq
    %v316 = vshrl.u32 %v315, 7
    %v317 = vsub.s32 2, %v316
    %v318 = vrot.slane %v305, %v317
    %v321 = vlaneseq
    %v322 = vshrl.u32 %v321, 7
    %v323 = vsub.s32 0, %v322
    %v324 = vrot.slane %v314, %v323
    %v325 = vlaneseq
    %v326 = vshrl.u32 %v325, 7
    %v327 = vsub.s32 0, %v326
    %v328 = vrot.slane %v318, %v327
    %v329 = vmul.f32 %v308, %v324
    %v330 = vmul.f32 %v308, %v328
    %v331 = vmax.f32 %v305, 0.0
    %v332 = vand.u32 2147483647, %v305
    %v333 = vsub.f32 0.0, %v332
    %v334 = vmul.f32 %v333, 1.442695
    %v335 = vpow.pop %v334
    %v336 = vadd.f32 %v335, 1.0
    %v337 = vlog2.pop %v336
    %v338 = vmul.f32 %v337, 0.6931472
    %v339 = vmul.f32 -0.5, %v335
    %v340 = vadd.f32 %v339, 1.0
    %v341 = vmul.f32 %v340, %v335
    %v342 = vand.u32 2147483647, %v335
    %vm343 = vcmp.lt.f32.partialorder %v342, 0.0004427343
    %v344 = vsel %vm343, %v341, %v338
    %v345 = vadd.f32 %v331, %v344
    %v347 = vlaneseq
    %v348 = vshrl.u32 %v347, 7
    %v349 = vsub.s32 0, %v348
    %v350 = vrot.slane %v345, %v349
    %v351 = vlaneseq
    %v352 = vshrl.u32 %v351, 7
    %v353 = vsub.s32 2, %v352
    %v354 = vrot.slane %v345, %v353
    %v357 = vlaneseq
    %v358 = vshrl.u32 %v357, 7
    %v359 = vsub.s32 0, %v358
    %v360 = vrot.slane %v350, %v359
    %v361 = vlaneseq
    %v362 = vshrl.u32 %v361, 7
    %v363 = vsub.s32 0, %v362
    %v364 = vrot.slane %v354, %v363
    %v365 = vsub.f32 %v329, %v360
    %v366 = vsub.f32 %v330, %v364
    %v367 = vadd.f32 %v290, %v365
    %v368 = vadd.f32 %v291, %v366
    %v369 = vmax.f32 %v367, %v368
    %370 = vmax.xlane.f32.xlu0 %v369
    %v371 = vpop.xlane.xlu0 %370
    %v372 = vsub.f32 %v367, %v371
    %v373 = vsub.f32 %v368, %v371
    %v374 = vmul.f32 %v372, 1.442695
    %v375 = vpow.pop %v374
    %v376 = vmul.f32 %v373, 1.442695
    %v377 = vpow.pop %v376
    %v378 = vadd.f32 %v375, %v377
    %379 = vadd.xlane.f32.xlu0 %v378
    %v380 = vpop.xlane.xlu0 %379
    %v381 = vlog2.pop %v380
    %v382 = vmul.f32 %v381, 0.6931472
    %v383 = vadd.f32 %v371, %v382
    %v384 = vrot.slane %v383, 4
    %v385 = vadd.f32 %v383, %v384
    %v386 = vrot.slane %v385, 2
    %v387 = vadd.f32 %v385, %v386
    %v388 = vrot.slane %v387, 1
    %v389 = vadd.f32 %v387, %v388
    %v390 = vmul.f32 %v389, -0.33333334
    %vm391 = vcmask 0
    %392 = vst.msk [vmem:[#allocation7] sm:$0x1] %vm391, %v390
    // Predicated region
    $region30: #{tpu_custom_call.1} parent=1 // pred_check
      _
    $region31: #{tpu_custom_call.1} parent=1 // pred_check_branch
      %394 = sbr.rel (0) target = $region33
    $region32: #{tpu_custom_call.1} parent=1 // pred_region
      %s396 = ssub.s32 16, 16
      %397 = vsyncadd [#allocation3], %s396
      %s399 = sshll.u32 [#allocation7], 4
      %s400 = int_to_ptr.vmem [resolvable:$true] %s399
      %402 = dma.vmem_to_hbm [thread:$0]  %s400, 16, %s5, [#allocation3]
    $region33: #{tpu_custom_call.1} parent=1 // pred_fallthru
      _
    // Predicated region
    $region34: #{tpu_custom_call.1} parent=1 // pred_check
      _
    $region35: #{tpu_custom_call.1} parent=1 // pred_check_branch
      %404 = sbr.rel (0) target = $region37
    $region36: #{tpu_custom_call.1} parent=1 // pred_region
      %405 = dma.done [#allocation3], 16
    $region37: #{tpu_custom_call.1} parent=1 // pred_fallthru
      _
    %406 = vsyncpa [#allocation3], 1
    %407 = vsyncpa [#allocation4], 1
    %408 = vsyncpa [#allocation6], 1

</llo_original>
